<compile_context>
chip_gen: v7x
topology: tpu7x:2x2x1
jax: 0.10.0
libtpu: 0.0.40
codegen_flags: <defaults>
</compile_context>

<pallas_src>
import functools

import jax
import jax.numpy as jnp
from jax.experimental import pallas as pl
from jax.experimental.pallas import tpu as pltpu


def clinical_dnn_kernel(x_ref, w1_ref, b1_ref, w2_ref, b2_ref, o_ref):
    # Layer 1: Linear (eval-mode BN folded into w1/b1) -> ReLU. Dropout = identity.
    h = jnp.dot(x_ref[...], w1_ref[...], preferred_element_type=jnp.float32)
    h = jnp.maximum(h + b1_ref[...], 0.0)
    # Layer 2: Linear (BN folded into w2/b2) -> ReLU.
    y = jnp.dot(h.astype(w2_ref.dtype), w2_ref[...],
                preferred_element_type=jnp.float32)
    y = jnp.maximum(y + b2_ref[...], 0.0)
    o_ref[...] = y.astype(o_ref.dtype)


def fold_batchnorm(gamma, beta, running_mean, running_var, eps=1e-5):
    """Fold eval-mode BatchNorm1d into per-feature scale/shift."""
    scale = gamma / jnp.sqrt(running_var + eps)
    shift = beta - running_mean * scale
    return scale, shift


def prepare_params(params, eps=1e-5):
    """One-time prep: fold BatchNorm into the Linear weights/biases.

    Hoisted out of the per-call path so each forward launches exactly one
    XLA op (the fused Pallas kernel) with no extra parameter-prep ops.
    """
    hidden_dim = params["w1"].shape[1]
    output_dim = params["w2"].shape[1]
    s1, t1 = fold_batchnorm(params["bn1_gamma"], params["bn1_beta"],
                            params["bn1_mean"], params["bn1_var"], eps)
    s2, t2 = fold_batchnorm(params["bn2_gamma"], params["bn2_beta"],
                            params["bn2_mean"], params["bn2_var"], eps)
    return {
        "w1": (params["w1"] * s1[None, :]).astype(jnp.float32),
        "b1": (params["b1"] * s1 + t1).reshape(1, hidden_dim).astype(jnp.float32),
        "w2": (params["w2"] * s2[None, :]).astype(jnp.float32),
        "b2": (params["b2"] * s2 + t2).reshape(1, output_dim).astype(jnp.float32),
    }


def _round_up(n, m):
    return ((n + m - 1) // m) * m


# Below this batch size a single grid step (no loop overhead) beats splitting
# the work across v7x's two TensorCores.
_MIN_SPLIT_BATCH = 256


@functools.partial(jax.jit, static_argnames=("block_batch", "out_dtype"))
def clinical_dnn_forward(x, prepared, block_batch=2048, out_dtype=jnp.float32):
    """Fused ClinicalDNN forward pass (eval mode) via a Pallas TPU kernel.

    x: (batch, input_dim) float32
    prepared: output of prepare_params() (BN already folded into w/b)
    """
    batch, input_dim = x.shape
    hidden_dim = prepared["w1"].shape[1]
    output_dim = prepared["w2"].shape[1]

    # ---- Batch tiling ------------------------------------------------------
    #  * small batch  -> one step (avoid grid-loop fixed cost ~0.35 us/step)
    #  * large batch  -> >= 2 "parallel" steps so both v7x TensorCores get
    #    work; tiles capped at block_batch (default 2048 rows keeps per-step
    #    DMA time well above the fixed step overhead on every generation).
    if batch <= _MIN_SPLIT_BATCH:
        bm = _round_up(max(batch, 8), 8)
    else:
        bm = min(_round_up(block_batch, 8), _round_up(pl.cdiv(batch, 2), 8))
    # Ragged final tile is handled by Pallas (masked writeback); rows are
    # independent so no wrapper-side jnp.pad / extra HBM pass over x is needed.
    grid = (pl.cdiv(batch, bm),)

    const = lambda i: (0, 0)

    def param_spec(shape):
        # Resident constants: single-buffered; only x / out are pipelined.
        return pl.BlockSpec(shape, const, pipeline_mode=pl.Buffered(1))

    out = pl.pallas_call(
        clinical_dnn_kernel,
        out_shape=jax.ShapeDtypeStruct((batch, output_dim), out_dtype),
        grid_spec=pltpu.PrefetchScalarGridSpec(
            num_scalar_prefetch=0,
            grid=grid,
            in_specs=[
                pl.BlockSpec((bm, input_dim), lambda i: (i, 0)),
                param_spec((input_dim, hidden_dim)),
                param_spec((1, hidden_dim)),
                param_spec((hidden_dim, output_dim)),
                param_spec((1, output_dim)),
            ],
            # Last dim (output_dim=32) equals the full array dim -> legal block,
            # no 128-wide zero padding and no wrapper column-slice copy.
            out_specs=pl.BlockSpec((bm, output_dim), lambda i: (i, 0)),
        ),
        compiler_params=pltpu.CompilerParams(
            dimension_semantics=("parallel",),
            vmem_limit_bytes=32 * 1024 * 1024,
        ),
    )(x, prepared["w1"], prepared["b1"], prepared["w2"], prepared["b2"])

    return out


def init_params(key, input_dim=42, hidden_dim=64, output_dim=32):
    """Deterministic synthetic parameter init (shapes match ClinicalDNN.__init__)."""
    k1, k2, k3, k4 = jax.random.split(key, 4)
    return {
        # Linear(input_dim, hidden_dim) -- stored as (in, out)
        "w1": 0.1 * jax.random.normal(k1, (input_dim, hidden_dim), jnp.float32),
        "b1": 0.01 * jax.random.normal(k2, (hidden_dim,), jnp.float32),
        # BatchNorm1d(hidden_dim) — PyTorch defaults
        "bn1_gamma": jnp.ones((hidden_dim,), jnp.float32),
        "bn1_beta": jnp.zeros((hidden_dim,), jnp.float32),
        "bn1_mean": jnp.zeros((hidden_dim,), jnp.float32),
        "bn1_var": jnp.ones((hidden_dim,), jnp.float32),
        # Linear(hidden_dim, output_dim) -- stored as (in, out)
        "w2": 0.1 * jax.random.normal(k3, (hidden_dim, output_dim), jnp.float32),
        "b2": 0.01 * jax.random.normal(k4, (output_dim,), jnp.float32),
        # BatchNorm1d(output_dim)
        "bn2_gamma": jnp.ones((output_dim,), jnp.float32),
        "bn2_beta": jnp.zeros((output_dim,), jnp.float32),
        "bn2_mean": jnp.zeros((output_dim,), jnp.float32),
        "bn2_var": jnp.ones((output_dim,), jnp.float32),
    }


def reference_forward(x, params, eps=1e-5):
    """Pure-JAX reference (eval-mode PyTorch semantics)."""
    h = x @ params["w1"] + params["b1"]
    h = (h - params["bn1_mean"]) / jnp.sqrt(params["bn1_var"] + eps)
    h = h * params["bn1_gamma"] + params["bn1_beta"]
    h = jnp.maximum(h, 0.0)
    # Dropout = identity (eval)
    y = h @ params["w2"] + params["b2"]
    y = (y - params["bn2_mean"]) / jnp.sqrt(params["bn2_var"] + eps)
    y = y * params["bn2_gamma"] + params["bn2_beta"]
    return jnp.maximum(y, 0.0)


if __name__ == "__main__":
    key = jax.random.PRNGKey(0)
    pkey, xkey = jax.random.split(key)

    input_dim, hidden_dim, output_dim = 42, 64, 32
    params = init_params(pkey, input_dim, hidden_dim, output_dim)
    prepared = prepare_params(params)  # one-time BN fold, off the hot path

    # 1) Small batch -> single-step (no-grid-loop) path.
    x = jax.random.normal(xkey, (16, input_dim), jnp.float32)
    out = jax.block_until_ready(clinical_dnn_forward(x, prepared))
    ref = reference_forward(x, params)
    assert out.shape == (16, output_dim), out.shape
    assert jnp.allclose(out, ref, atol=1e-4, rtol=1e-4), (
        float(jnp.max(jnp.abs(out - ref))))

    # 2) Ragged multi-step grid (300 rows, 128-row tiles -> 3 steps, no jnp.pad).
    x2 = jax.random.normal(jax.random.PRNGKey(1), (300, input_dim), jnp.float32)
    out2 = jax.block_until_ready(
        clinical_dnn_forward(x2, prepared, block_batch=128))
    ref2 = reference_forward(x2, params)
    assert out2.shape == (300, output_dim), out2.shape
    assert jnp.allclose(out2, ref2, atol=1e-4, rtol=1e-4), (
        float(jnp.max(jnp.abs(out2 - ref2))))

    # 3) bf16 output path (halves the dominant writeback stream); looser tol.
    x3 = jax.random.normal(jax.random.PRNGKey(2), (64, input_dim), jnp.float32)
    out3 = jax.block_until_ready(
        clinical_dnn_forward(x3, prepared, out_dtype=jnp.bfloat16))
    ref3 = reference_forward(x3, params)
    assert out3.shape == (64, output_dim), out3.shape
    assert out3.dtype == jnp.bfloat16, out3.dtype
    assert jnp.allclose(out3.astype(jnp.float32), ref3, atol=5e-2, rtol=5e-2), (
        float(jnp.max(jnp.abs(out3.astype(jnp.float32) - ref3))))

    print("KERNEL_OK")
</pallas_src>

<mosaic_0001>
module attributes {stable_mosaic.version = 11 : i64} {
  func.func @clinical_dnn_kernel(%arg0: i32, %arg1: memref<16x42xf32, #tpu.memory_space<vmem>>, %arg2: memref<42x64xf32, #tpu.memory_space<vmem>>, %arg3: memref<1x64xf32, #tpu.memory_space<vmem>>, %arg4: memref<64x32xf32, #tpu.memory_space<vmem>>, %arg5: memref<1x32xf32, #tpu.memory_space<vmem>>, %arg6: memref<16x32xf32, #tpu.memory_space<vmem>>) attributes {dimension_semantics = [#tpu.dimension_semantics<parallel>], iteration_bounds = array<i64: 1>, scalar_prefetch = 0 : i64, scratch_operands = 0 : i64, tpu.core_type = #tpu.core_type<tc>, window_params = [{transform_indices = @transform_0, window_bounds = array<i64: 16, 42>}, {pipeline_mode = #tpu.pipeline_mode<synchronous>, transform_indices = @transform_1, window_bounds = array<i64: 42, 64>}, {pipeline_mode = #tpu.pipeline_mode<synchronous>, transform_indices = @transform_2, window_bounds = array<i64: 1, 64>}, {pipeline_mode = #tpu.pipeline_mode<synchronous>, transform_indices = @transform_3, window_bounds = array<i64: 64, 32>}, {pipeline_mode = #tpu.pipeline_mode<synchronous>, transform_indices = @transform_4, window_bounds = array<i64: 1, 32>}, {transform_indices = @transform_5, window_bounds = array<i64: 16, 32>}]} {
    %c0 = arith.constant 0 : index
    %c0_0 = arith.constant 0 : index
    %0 = vector.load %arg1[%c0, %c0_0] : memref<16x42xf32, #tpu.memory_space<vmem>>, vector<16x42xf32>
    %c0_1 = arith.constant 0 : index
    %c0_2 = arith.constant 0 : index
    %1 = vector.load %arg2[%c0_1, %c0_2] : memref<42x64xf32, #tpu.memory_space<vmem>>, vector<42x64xf32>
    %cst = arith.constant dense<0.000000e+00> : vector<16x64xf32>
    %2 = tpu.matmul %0, %1, %cst {dimension_numbers = #tpu.dot_dimension_numbers<[1], [0], [0], [1], [0, 0, 1, 1], [], []>} : vector<16x42xf32>, vector<42x64xf32>, vector<16x64xf32> -> vector<16x64xf32>
    %c0_3 = arith.constant 0 : index
    %c0_4 = arith.constant 0 : index
    %3 = vector.load %arg3[%c0_3, %c0_4] : memref<1x64xf32, #tpu.memory_space<vmem>>, vector<1x64xf32>
    %4 = vector.broadcast %3 : vector<1x64xf32> to vector<16x64xf32>
    %5 = arith.addf %2, %4 : vector<16x64xf32>
    %cst_5 = arith.constant 0.000000e+00 : f32
    %6 = vector.broadcast %cst_5 : f32 to vector<16x64xf32>
    %7 = arith.maximumf %5, %6 : vector<16x64xf32>
    %c0_6 = arith.constant 0 : index
    %c0_7 = arith.constant 0 : index
    %8 = vector.load %arg4[%c0_6, %c0_7] : memref<64x32xf32, #tpu.memory_space<vmem>>, vector<64x32xf32>
    %cst_8 = arith.constant dense<0.000000e+00> : vector<16x32xf32>
    %9 = tpu.matmul %7, %8, %cst_8 {dimension_numbers = #tpu.dot_dimension_numbers<[1], [0], [0], [1], [0, 0, 1, 1], [], []>} : vector<16x64xf32>, vector<64x32xf32>, vector<16x32xf32> -> vector<16x32xf32>
    %c0_9 = arith.constant 0 : index
    %c0_10 = arith.constant 0 : index
    %10 = vector.load %arg5[%c0_9, %c0_10] : memref<1x32xf32, #tpu.memory_space<vmem>>, vector<1x32xf32>
    %11 = vector.broadcast %10 : vector<1x32xf32> to vector<16x32xf32>
    %12 = arith.addf %9, %11 : vector<16x32xf32>
    %cst_11 = arith.constant 0.000000e+00 : f32
    %13 = vector.broadcast %cst_11 : f32 to vector<16x32xf32>
    %14 = arith.maximumf %12, %13 : vector<16x32xf32>
    %c0_12 = arith.constant 0 : index
    %c0_13 = arith.constant 0 : index
    %15 = vector.load %arg6[%c0_12, %c0_13] : memref<16x32xf32, #tpu.memory_space<vmem>>, vector<16x32xf32>
    tpu.vector_store %arg6[%c0_12, %c0_13], %14 {strides = array<i32>} : memref<16x32xf32, #tpu.memory_space<vmem>>, vector<16x32xf32>,
    return
  }
  func.func @transform_0(%arg0: i32) -> (i32, i32) {
    %c0_i32 = arith.constant 0 : i32
    %c0_i32_0 = arith.constant 0 : i32
    return %arg0, %c0_i32 : i32, i32
  }
  func.func @transform_1(%arg0: i32) -> (i32, i32) {
    %c0_i32 = arith.constant 0 : i32
    %c0_i32_0 = arith.constant 0 : i32
    %c0_i32_1 = arith.constant 0 : i32
    return %c0_i32, %c0_i32_0 : i32, i32
  }
  func.func @transform_2(%arg0: i32) -> (i32, i32) {
    %c0_i32 = arith.constant 0 : i32
    %c0_i32_0 = arith.constant 0 : i32
    %c0_i32_1 = arith.constant 0 : i32
    return %c0_i32, %c0_i32_0 : i32, i32
  }
  func.func @transform_3(%arg0: i32) -> (i32, i32) {
    %c0_i32 = arith.constant 0 : i32
    %c0_i32_0 = arith.constant 0 : i32
    %c0_i32_1 = arith.constant 0 : i32
    return %c0_i32, %c0_i32_0 : i32, i32
  }
  func.func @transform_4(%arg0: i32) -> (i32, i32) {
    %c0_i32 = arith.constant 0 : i32
    %c0_i32_0 = arith.constant 0 : i32
    %c0_i32_1 = arith.constant 0 : i32
    return %c0_i32, %c0_i32_0 : i32, i32
  }
  func.func @transform_5(%arg0: i32) -> (i32, i32) {
    %c0_i32 = arith.constant 0 : i32
    %c0_i32_0 = arith.constant 0 : i32
    return %arg0, %c0_i32 : i32, i32
  }
}

</mosaic_0001>

<llo_original>
// kernel: clinical_dnn_forward.1
$region0: #{clinical_dnn_forward.1}
  #allocation0 [shape = 'u32[]', space=smem, size = 0x4, offset = 0x4, fixed_abs, tag = 'smem constant byte address 0x4 - core index']
  #allocation1 [shape = 'u32[144,128]{1,0:T(1,128)}', space=vmem, size = 0x12000, scoped, tag = 'internal scratch']
  %s0 = inlined_call_operand.vmem [shape: f32[16,42], index: 0, kind: input, shape index: {}]
  %s1 = inlined_call_operand.vmem [shape: f32[42,64], index: 1, kind: input, shape index: {}]
  %s2 = inlined_call_operand.vmem [shape: f32[1,64], index: 2, kind: input, shape index: {}]
  %s3 = inlined_call_operand.vmem [shape: f32[64,32], index: 3, kind: input, shape index: {}]
  %s4 = inlined_call_operand.vmem [shape: f32[1,32], index: 4, kind: input, shape index: {}]
  %s5 = inlined_call_operand.hbm [shape: f32[16,32], index: 5, kind: output, shape index: {}]
  %s6 = sld [smem:[#allocation0]]
  $region30: #{clinical_dnn_forward.1} parent=0
    _
  %s8 = ssub.s32 1, %s6
  %s9 = scalar_select 0, %s8, %s6
  $region1: #{clinical_dnn_forward.1} parent=0
    #allocation2 [shape = 'u8[8192]{0}', space=vmem, size = 0x2000, scoped, tag = 'output window, operand 0, single buffered']
    #allocation3 [shape = 's32[1]{0}', space=sflag, size = 0x4, scoped, tag = 'scoped memory for clinical_dnn_forward.1']
    %10 = vsyncpa [#allocation3], 0
    // Predicated region
    $region2: #{clinical_dnn_forward.1} parent=1 // pred_check
      _
    $region3: #{clinical_dnn_forward.1} parent=1 // pred_check_branch
      %12 = sbr.rel (0) target = $region5
    $region4: #{clinical_dnn_forward.1} parent=1 // pred_region
      _
    $region5: #{clinical_dnn_forward.1} parent=1 // pred_fallthru
      _
    // Predicated region
    $region6: #{clinical_dnn_forward.1} parent=1 // pred_check
      _
    $region7: #{clinical_dnn_forward.1} parent=1 // pred_check_branch
      %14 = sbr.rel (0) target = $region9
    $region8: #{clinical_dnn_forward.1} parent=1 // pred_region
      _
    $region9: #{clinical_dnn_forward.1} parent=1 // pred_fallthru
      _
    // Predicated region
    $region10: #{clinical_dnn_forward.1} parent=1 // pred_check
      _
    $region11: #{clinical_dnn_forward.1} parent=1 // pred_check_branch
      %16 = sbr.rel (0) target = $region13
    $region12: #{clinical_dnn_forward.1} parent=1 // pred_region
      _
    $region13: #{clinical_dnn_forward.1} parent=1 // pred_fallthru
      _
    // Predicated region
    $region14: #{clinical_dnn_forward.1} parent=1 // pred_check
      _
    $region15: #{clinical_dnn_forward.1} parent=1 // pred_check_branch
      %18 = sbr.rel (0) target = $region17
    $region16: #{clinical_dnn_forward.1} parent=1 // pred_region
      _
    $region17: #{clinical_dnn_forward.1} parent=1 // pred_fallthru
      _
    // Predicated region
    $region18: #{clinical_dnn_forward.1} parent=1 // pred_check
      _
    $region19: #{clinical_dnn_forward.1} parent=1 // pred_check_branch
      %20 = sbr.rel (0) target = $region21
    $region20: #{clinical_dnn_forward.1} parent=1 // pred_region
      _
    $region21: #{clinical_dnn_forward.1} parent=1 // pred_fallthru
      _
    %v21 = vld [vmem:[%s0] sm:$0xff]
    %v22 = vld [vmem:[%s0 + $0x8] sm:$0xff]
    %v23 = vld [vmem:[%s1] sm:$0xff]
    %v24 = vld [vmem:[%s1 + $0x8] sm:$0xff]
    %v25 = vld [vmem:[%s1 + $0x10] sm:$0xff]
    %v26 = vld [vmem:[%s1 + $0x18] sm:$0xff]
    %v27 = vld [vmem:[%s1 + $0x20] sm:$0xff]
    %v28 = vld [vmem:[%s1 + $0x28] sm:$0x3]
    %v29 = vld [vmem:[%s2] sm:$0x1]
    %v31 = vlaneseq
    %v32 = vshrl.u32 %v31, 7
    %v33 = vsub.s32 0, %v32
    %v34 = vrot.slane %v29, %v33
    %vm36 = vcmask 343040
    %v38 = vsel %vm36, %v21, 0
    %v41 = vsel %vm36, %v22, 0
    %vm43 = vcmask 1041408
    %v45 = vsel %vm43, %v28, 0
    %47 = vmatprep.subr.mxu0 0.0
    %48 = vmatpush1.msra.mxu0 %v23
    %49 = vmatprep.subr.mxu0 0.0
    %50 = vmatpush1.msra.mxu0 %v24
    %51 = vmatprep.subr.mxu0 0.0
    %52 = vmatpush1.msra.mxu0 %v25
    %53 = vmatprep.subr.mxu0 0.0
    %54 = vmatpush1.msra.mxu0 %v26
    %55 = vmatprep.subr.mxu0 0.0
    %56 = vmatpush1.msra.mxu0 %v27
    %57 = vmatprep.subr.mxu0 0.0
    %58 = vmatpush1.msra.mxu0 %v45
    %59 = vmatprep.subr.mxu0 0.0
    %60 = vmatpush1.msra.mxu0 0.0
    %61 = vmatprep.subr.mxu0 0.0
    %62 = vmatpush1.msra.mxu0 0.0
    %63 = vmatprep.subr.mxu0 0.0
    %64 = vmatpush1.msra.mxu0 0.0
    %65 = vmatprep.subr.mxu0 0.0
    %66 = vmatpush1.msra.mxu0 0.0
    %67 = vmatprep.subr.mxu0 0.0
    %68 = vmatpush1.msra.mxu0 0.0
    %69 = vmatprep.subr.mxu0 0.0
    %70 = vmatpush1.msra.mxu0 0.0
    %71 = vmatprep.subr.mxu0 0.0
    %72 = vmatpush1.msra.mxu0 0.0
    %73 = vmatprep.subr.mxu0 0.0
    %74 = vmatpush1.msra.mxu0 0.0
    %75 = vmatprep.subr.mxu0 0.0
    %76 = vmatpush1.msra.mxu0 0.0
    %77 = vmatprep.subr.mxu0 0.0
    %78 = vmatpush1.msra.mxu0 0.0
    %79 = vmatprep.subr.mxu0 0.0
    %80 = vmatpush1.msra.mxu0 0.0
    %81 = vmatprep.subr.mxu0 0.0
    %82 = vmatpush1.msra.mxu0 0.0
    %83 = vmatprep.subr.mxu0 0.0
    %84 = vmatpush1.msra.mxu0 0.0
    %85 = vmatprep.subr.mxu0 0.0
    %86 = vmatpush1.msra.mxu0 0.0
    %87 = vmatprep.subr.mxu0 0.0
    %88 = vmatpush1.msra.mxu0 0.0
    %89 = vmatprep.subr.mxu0 0.0
    %90 = vmatpush1.msra.mxu0 0.0
    %91 = vmatprep.subr.mxu0 0.0
    %92 = vmatpush1.msra.mxu0 0.0
    %93 = vmatprep.subr.mxu0 0.0
    %94 = vmatpush1.msra.mxu0 0.0
    %95 = vmatprep.subr.mxu0 0.0
    %96 = vmatpush1.msra.mxu0 0.0
    %97 = vmatprep.subr.mxu0 0.0
    %98 = vmatpush1.msra.mxu0 0.0
    %99 = vmatprep.subr.mxu0 0.0
    %100 = vmatpush1.msra.mxu0 0.0
    %101 = vmatprep.subr.mxu0 0.0
    %102 = vmatpush1.msra.mxu0 0.0
    %103 = vmatprep.subr.mxu0 0.0
    %104 = vmatpush1.msra.mxu0 0.0
    %105 = vmatprep.subr.mxu0 0.0
    %106 = vmatpush1.msra.mxu0 0.0
    %107 = vmatprep.subr.mxu0 0.0
    %108 = vmatpush1.msra.mxu0 0.0
    %109 = vmatprep.subr.mxu0 0.0
    %110 = vmatpush1.msra.mxu0 0.0
    %111 = vmatprep.mubr.f32.mxu0 0.0
    %112 = vmatmul.mubr.f32.gmra.mrb[0].mxu0 %v38
    %v113 = vpop.f32.mrb[0].mxu0
    %v114 = vadd.f32 %v34, %v113
    %v115 = vpop.f32.mrb[0].mxu0
    %116 = vmatprep.mubr.f32.mxu0 0.0
    %117 = vmatmul.mubr.f32.gmra.mrb[0].mxu0 %v41
    %v118 = vpop.f32.mrb[0].mxu0
    %v119 = vadd.f32 %v34, %v118
    %v120 = vpop.f32.mrb[0].mxu0
    %121 = vdwg.mxu0
    %v122 = vmax.f32 %v114, 0.0
    %v123 = vmax.f32 %v119, 0.0
    %v124 = vld [vmem:[%s3] sm:$0xff]
    %v125 = vld [vmem:[%s3 + $0x8] sm:$0xff]
    %v126 = vld [vmem:[%s3 + $0x10] sm:$0xff]
    %v127 = vld [vmem:[%s3 + $0x18] sm:$0xff]
    %v128 = vld [vmem:[%s3 + $0x20] sm:$0xff]
    %v129 = vld [vmem:[%s3 + $0x28] sm:$0xff]
    %v130 = vld [vmem:[%s3 + $0x30] sm:$0xff]
    %v131 = vld [vmem:[%s3 + $0x38] sm:$0xff]
    %v132 = vld [vmem:[%s4] sm:$0x1]
    %v134 = vlaneseq
    %v135 = vshrl.u32 %v134, 7
    %v136 = vsub.s32 0, %v135
    %v137 = vrot.slane %v132, %v136
    %vm139 = vcmask 523264
    %v141 = vsel %vm139, %v122, 0
    %v144 = vsel %vm139, %v123, 0
    %146 = vmatprep.subr.mxu0 0.0
    %147 = vmatpush1.msra.mxu0 %v124
    %148 = vmatprep.subr.mxu0 0.0
    %149 = vmatpush1.msra.mxu0 %v125
    %150 = vmatprep.subr.mxu0 0.0
    %151 = vmatpush1.msra.mxu0 %v126
    %152 = vmatprep.subr.mxu0 0.0
    %153 = vmatpush1.msra.mxu0 %v127
    %154 = vmatprep.subr.mxu0 0.0
    %155 = vmatpush1.msra.mxu0 %v128
    %156 = vmatprep.subr.mxu0 0.0
    %157 = vmatpush1.msra.mxu0 %v129
    %158 = vmatprep.subr.mxu0 0.0
    %159 = vmatpush1.msra.mxu0 %v130
    %160 = vmatprep.subr.mxu0 0.0
    %161 = vmatpush1.msra.mxu0 %v131
    %162 = vmatprep.subr.mxu0 0.0
    %163 = vmatpush1.msra.mxu0 0.0
    %164 = vmatprep.subr.mxu0 0.0
    %165 = vmatpush1.msra.mxu0 0.0
    %166 = vmatprep.subr.mxu0 0.0
    %167 = vmatpush1.msra.mxu0 0.0
    %168 = vmatprep.subr.mxu0 0.0
    %169 = vmatpush1.msra.mxu0 0.0
    %170 = vmatprep.subr.mxu0 0.0
    %171 = vmatpush1.msra.mxu0 0.0
    %172 = vmatprep.subr.mxu0 0.0
    %173 = vmatpush1.msra.mxu0 0.0
    %174 = vmatprep.subr.mxu0 0.0
    %175 = vmatpush1.msra.mxu0 0.0
    %176 = vmatprep.subr.mxu0 0.0
    %177 = vmatpush1.msra.mxu0 0.0
    %178 = vmatprep.subr.mxu0 0.0
    %179 = vmatpush1.msra.mxu0 0.0
    %180 = vmatprep.subr.mxu0 0.0
    %181 = vmatpush1.msra.mxu0 0.0
    %182 = vmatprep.subr.mxu0 0.0
    %183 = vmatpush1.msra.mxu0 0.0
    %184 = vmatprep.subr.mxu0 0.0
    %185 = vmatpush1.msra.mxu0 0.0
    %186 = vmatprep.subr.mxu0 0.0
    %187 = vmatpush1.msra.mxu0 0.0
    %188 = vmatprep.subr.mxu0 0.0
    %189 = vmatpush1.msra.mxu0 0.0
    %190 = vmatprep.subr.mxu0 0.0
    %191 = vmatpush1.msra.mxu0 0.0
    %192 = vmatprep.subr.mxu0 0.0
    %193 = vmatpush1.msra.mxu0 0.0
    %194 = vmatprep.subr.mxu0 0.0
    %195 = vmatpush1.msra.mxu0 0.0
    %196 = vmatprep.subr.mxu0 0.0
    %197 = vmatpush1.msra.mxu0 0.0
    %198 = vmatprep.subr.mxu0 0.0
    %199 = vmatpush1.msra.mxu0 0.0
    %200 = vmatprep.subr.mxu0 0.0
    %201 = vmatpush1.msra.mxu0 0.0
    %202 = vmatprep.subr.mxu0 0.0
    %203 = vmatpush1.msra.mxu0 0.0
    %204 = vmatprep.subr.mxu0 0.0
    %205 = vmatpush1.msra.mxu0 0.0
    %206 = vmatprep.subr.mxu0 0.0
    %207 = vmatpush1.msra.mxu0 0.0
    %208 = vmatprep.subr.mxu0 0.0
    %209 = vmatpush1.msra.mxu0 0.0
    %210 = vmatprep.mubr.f32.mxu0 0.0
    %211 = vmatmul.mubr.f32.gmra.mrb[0].mxu0 %v141
    %v212 = vpop.f32.mrb[0].mxu0
    %v213 = vadd.f32 %v137, %v212
    %v214 = vpop.f32.mrb[0].mxu0
    %215 = vmatprep.mubr.f32.mxu0 0.0
    %216 = vmatmul.mubr.f32.gmra.mrb[0].mxu0 %v144
    %v217 = vpop.f32.mrb[0].mxu0
    %v218 = vadd.f32 %v137, %v217
    %v219 = vpop.f32.mrb[0].mxu0
    %220 = vdwg.mxu0
    %v221 = vmax.f32 %v213, 0.0
    %v222 = vmax.f32 %v218, 0.0
    %vm223 = vcmask 261120
    %224 = vst.msk [vmem:[#allocation2] sm:$0xff] %vm223, %v221
    %225 = vst.msk [vmem:[#allocation2 + $0x8] sm:$0xff] %vm223, %v222
    // Predicated region
    $region22: #{clinical_dnn_forward.1} parent=1 // pred_check
      _
    $region23: #{clinical_dnn_forward.1} parent=1 // pred_check_branch
      %227 = sbr.rel (0) target = $region25
    $region24: #{clinical_dnn_forward.1} parent=1 // pred_region
      %s229 = ssub.s32 256, 256
      %230 = vsyncadd [#allocation3], %s229
      %s231 = sshll.u32 [#allocation2], 4
      %s232 = int_to_ptr.vmem [resolvable:$true] %s231
      %237 = dma.vmem_to_hbm [thread:$0]  %s232, 256, %s5, [#allocation3], 128, 128, 8
    $region25: #{clinical_dnn_forward.1} parent=1 // pred_fallthru
      _
    // Predicated region
    $region26: #{clinical_dnn_forward.1} parent=1 // pred_check
      _
    $region27: #{clinical_dnn_forward.1} parent=1 // pred_check_branch
      %239 = sbr.rel (0) target = $region29
    $region28: #{clinical_dnn_forward.1} parent=1 // pred_region
      %240 = dma.done [#allocation3], 256
    $region29: #{clinical_dnn_forward.1} parent=1 // pred_fallthru
      _
    %241 = vsyncpa [#allocation3], 1

</llo_original>
